<compile_context>
chip_gen: v5e
topology: v5e:2x2
jax: 0.10.0
libtpu: 0.0.40
codegen_flags: <defaults>
</compile_context>

<pallas_src>
import numpy as np
import jax
import jax.numpy as jnp
from jax.experimental import pallas as pl
from jax.experimental.pallas import tpu as pltpu

# ---------------- synthetic spec / operator table (deterministic) ------------
TOTAL_WIDTH = 16
COUNTER_START = 2          # spec.start_index["counter"] (== counter slice start)
COUNTER_WIDTH = 4
HELPER_START = 6           # spec.slices["counter_helper"].start
NUM_OPERATORS = 6
OPS_WITH_COUNTER = (1, 4)  # operators that registered a CountUpWithRegroup action

LANES = 128
GROUPS = LANES // TOTAL_WIDTH     # 8 batch rows per 128-lane vector row
MAX_TILE_ROWS = 4096              # rows of the (R,128) layout per grid step:
                                  # 4096*128*4B = 2 MiB per state buffer.


def build_mask_tables():
    """Replicates register_operator(): one boolean row per FSM operator."""
    counter_idx = np.zeros((NUM_OPERATORS, TOTAL_WIDTH), dtype=bool)
    regroup_idx = np.zeros((NUM_OPERATORS, TOTAL_WIDTH), dtype=bool)
    start_idx = np.zeros((NUM_OPERATORS, TOTAL_WIDTH), dtype=bool)
    for o in OPS_WITH_COUNTER:
        counter_idx[o, COUNTER_START:COUNTER_START + COUNTER_WIDTH] = True
        regroup_idx[o, HELPER_START:HELPER_START + COUNTER_WIDTH] = True
        start_idx[o, COUNTER_START] = True
    return counter_idx, regroup_idx, start_idx


# --------------------------------- kernel ------------------------------------
def count_advance_regroup_kernel(active_ref, state_ref, out_ref):
    state = state_ref[...]                         # (tr, 128) int32
    active = active_ref[...] != 0                  # (tr, 128) bool (group-replicated)

    # Lane offset within each 16-lane group -> static slice masks (pure VPU).
    off = jax.lax.broadcasted_iota(jnp.int32, state.shape, 1) % TOTAL_WIDTH
    is_counter = (off >= COUNTER_START) & (off < COUNTER_START + COUNTER_WIDTH)
    is_start = off == COUNTER_START

    x = state.astype(jnp.float32)

    # Align each counter digit with its regroup base: the helper sits
    # (HELPER_START - COUNTER_START) lanes to the right within the same
    # 16-lane group.  The wrap-around of the rotation only lands on
    # non-counter lanes, so it is harmless.
    base = pltpu.roll(x, LANES - (HELPER_START - COUNTER_START), axis=1)

    # counter[start] += 1 on rows whose operator carries the counter action.
    c1 = x + jnp.where(is_start & active, 1.0, 0.0)

    # floor_divide / remainder.  Inactive / non-counter lanes get denom=1 so we
    # never divide by zero; active rows must have regroup bases >= 1 (same
    # precondition as the torch reference).  Integer-exact for |values| < 2^24.
    denom = jnp.where(active & is_counter, base, 1.0)
    q = jnp.floor(c1 / denom)
    q = q - (q * denom > c1).astype(jnp.float32)   # downward integer-exact fixup
    rem = c1 - denom * q

    # torch.roll(q, 1) then q[start] = 0  ==  carry digit i -> digit i+1.
    # (roll wrap across 16-lane groups only reaches start lanes, which are
    # zeroed, and non-counter lanes, which are never written.)
    carry = pltpu.roll(jnp.where(is_counter, q, 0.0), 1, axis=1)
    carry = jnp.where(is_start, 0.0, carry)

    new_counter = (rem + carry).astype(jnp.int32)
    # Single merged full-block store; untouched lanes keep exact int32 values.
    out_ref[...] = jnp.where(is_counter & active, new_counter, state)


# -------------------------------- wrapper ------------------------------------
def _choose_tile_rows(rows_needed: int) -> int:
    """Row tile for the (R, 128) layout: full block for tiny inputs, otherwise
    a sublane multiple capped at MAX_TILE_ROWS and at ~half the work so large
    batches get >= 2 'parallel' grid steps (v7x megacore + DMA overlap)."""
    if rows_needed <= 8:
        return rows_needed
    half = -(-rows_needed // 2)
    half = -(-half // 8) * 8
    return min(MAX_TILE_ROWS, half)


def count_advance_regroup(state, operation, prediction,
                          counter_idx, regroup_idx, start_idx):
    # `prediction` mirrors OperatorAction.forward but is unused by this action.
    # TODO(synk): CBTensor.rebind_to_spec / set_channels bookkeeping has no
    # Pallas analogue; `state` is assumed already laid out per the spec.
    del prediction
    del regroup_idx, start_idx   # slice positions are static in the spec; only
                                 # the per-operator "has counter" flag is data.
    B, TW = state.shape
    assert TW == TOTAL_WIDTH and LANES % TW == 0
    state = state.astype(jnp.int32)

    # Per-operator activity flag -> per-row flag, gathered in plain JAX (tiny).
    has_counter = jnp.any(jnp.asarray(counter_idx), axis=-1).astype(jnp.int8)
    active_rows = has_counter[operation.astype(jnp.int32)]          # (B,) int8

    rows_needed = -(-B // GROUPS)                 # 128-lane rows covering B
    tile_r = _choose_tile_rows(rows_needed)
    R = -(-rows_needed // tile_r) * tile_r        # padded row count (grid-even)
    bp = R * GROUPS

    if bp != B:
        state = jnp.pad(state, ((0, bp - B), (0, 0)))
        active_rows = jnp.pad(active_rows, (0, bp - B))   # padded rows inactive

    # Lane-dense layout: 8 batch rows per 128-lane vector row (contiguous
    # row-major regrouping since 16 divides 128).
    state_ld = state.reshape(R, LANES)
    active_ld = jnp.broadcast_to(
        active_rows[:, None], (bp, TOTAL_WIDTH)).reshape(R, LANES)   # int8

    out = pl.pallas_call(
        count_advance_regroup_kernel,
        out_shape=jax.ShapeDtypeStruct((R, LANES), jnp.int32),
        grid_spec=pltpu.PrefetchScalarGridSpec(
            num_scalar_prefetch=0,
            grid=(R // tile_r,),
            in_specs=[pl.BlockSpec((tile_r, LANES), lambda i: (i, 0)),   # active
                      pl.BlockSpec((tile_r, LANES), lambda i: (i, 0))],  # state
            out_specs=pl.BlockSpec((tile_r, LANES), lambda i: (i, 0))),
        # NOTE: when padding / reshape materialize a copy this aliases that
        # temporary rather than the caller's buffer; it still avoids a separate
        # output allocation.
        input_output_aliases={1: 0},
        compiler_params=pltpu.CompilerParams(
            dimension_semantics=("parallel",)),
    )(active_ld, state_ld)
    return out.reshape(bp, TOTAL_WIDTH)[:B]


# ------------------------- numpy reference (torch semantics) ------------------
def reference(state, operation, counter_idx, regroup_idx, start_idx):
    tensor = np.array(state, dtype=np.int64)
    cm = counter_idx[operation]
    rm = regroup_idx[operation]
    sm = start_idx[operation]
    flat_counters = tensor[cm].copy()
    flat_regroups = tensor[rm]
    flat_start = sm[cm]
    flat_counters[flat_start] += 1
    q = np.floor_divide(flat_counters, flat_regroups)
    flat_counters = flat_counters - flat_regroups * q
    q = np.roll(q, 1)
    q[flat_start] = 0
    flat_counters = flat_counters + q
    tensor[cm] = flat_counters
    return tensor.astype(np.int32)


# ---------------------------------- main --------------------------------------
if __name__ == "__main__":
    B = 8
    counter_idx, regroup_idx, start_idx = build_mask_tables()

    key = jax.random.PRNGKey(0)
    k_state, k_cnt, k_help, k_op, k_pred = jax.random.split(key, 5)

    # FSM state: random ints, counter digits in [0, 9], helper (regroup bases)
    # strictly positive in [2, 9].
    state = jax.random.randint(k_state, (B, TOTAL_WIDTH), 0, 20, dtype=jnp.int32)
    cnt_vals = jax.random.randint(k_cnt, (B, COUNTER_WIDTH), 0, 9, dtype=jnp.int32)
    base_vals = jax.random.randint(k_help, (B, COUNTER_WIDTH), 2, 10, dtype=jnp.int32)
    state = state.at[:, COUNTER_START:COUNTER_START + COUNTER_WIDTH].set(cnt_vals)
    state = state.at[:, HELPER_START:HELPER_START + COUNTER_WIDTH].set(base_vals)

    operation = jax.random.randint(k_op, (B,), 0, NUM_OPERATORS, dtype=jnp.int32)
    prediction = jax.random.randint(k_pred, (B,), 0, 100, dtype=jnp.int32)

    # Snapshot inputs before the (output-aliased) kernel call.
    state_np = np.asarray(state)
    op_np = np.asarray(operation)

    run = jax.jit(count_advance_regroup)
    out = run(state, operation, prediction, counter_idx, regroup_idx, start_idx)
    out = jax.block_until_ready(out)

    ref = reference(state_np, op_np, counter_idx, regroup_idx, start_idx)
    np.testing.assert_array_equal(np.asarray(out), ref)
    print("KERNEL_OK")
</pallas_src>

<mosaic_0001>
module attributes {stable_mosaic.version = 11 : i64} {
  func.func @count_advance_regroup_kernel(%arg0: i32, %arg1: memref<1x128xi8, #tpu.memory_space<vmem>>, %arg2: memref<1x128xi32, #tpu.memory_space<vmem>>, %arg3: memref<1x128xi32, #tpu.memory_space<vmem>>) attributes {dimension_semantics = [#tpu.dimension_semantics<parallel>], iteration_bounds = array<i64: 1>, scalar_prefetch = 0 : i64, scratch_operands = 0 : i64, tpu.core_type = #tpu.core_type<tc>, window_params = [{transform_indices = @transform_0, window_bounds = array<i64: 1, 128>}, {transform_indices = @transform_1, window_bounds = array<i64: 1, 128>}, {transform_indices = @transform_2, window_bounds = array<i64: 1, 128>}]} {
    %c0 = arith.constant 0 : index
    %c0_0 = arith.constant 0 : index
    %0 = vector.load %arg2[%c0, %c0_0] : memref<1x128xi32, #tpu.memory_space<vmem>>, vector<1x128xi32>
    %c0_1 = arith.constant 0 : index
    %c0_2 = arith.constant 0 : index
    %1 = vector.load %arg1[%c0_1, %c0_2] : memref<1x128xi8, #tpu.memory_space<vmem>>, vector<1x128xi8>
    %c0_i8 = arith.constant 0 : i8
    %2 = vector.broadcast %c0_i8 : i8 to vector<1x128xi8>
    %3 = arith.cmpi ne, %1, %2 : vector<1x128xi8>
    %4 = tpu.iota {dimensions = array<i32: 1>} : vector<1x128xi32>
    %c16_i32 = arith.constant 16 : i32
    %c0_i32 = arith.constant 0 : i32
    %5 = arith.cmpi eq, %c16_i32, %c0_i32 : i32
    %c1_i32 = arith.constant 1 : i32
    %6 = arith.select %5, %c1_i32, %c16_i32 : i32
    %7 = vector.broadcast %6 : i32 to vector<1x128xi32>
    %8 = arith.remsi %4, %7 : vector<1x128xi32>
    %c0_i32_3 = arith.constant 0 : i32
    %9 = vector.broadcast %c0_i32_3 : i32 to vector<1x128xi32>
    %10 = arith.cmpi ne, %8, %9 : vector<1x128xi32>
    %c0_i32_4 = arith.constant 0 : i32
    %11 = vector.broadcast %c0_i32_4 : i32 to vector<1x128xi32>
    %12 = arith.cmpi slt, %8, %11 : vector<1x128xi32>
    %c0_i32_5 = arith.constant 0 : i32
    %13 = arith.cmpi slt, %6, %c0_i32_5 : i32
    %14 = vector.broadcast %13 : i1 to vector<1x128xi1>
    %15 = vector.broadcast %14 : vector<1x128xi1> to vector<1x128xi1>
    %16 = arith.xori %12, %15 : vector<1x128xi1>
    %17 = arith.andi %16, %10 : vector<1x128xi1>
    %18 = vector.broadcast %6 : i32 to vector<1x128xi32>
    %19 = arith.addi %8, %18 : vector<1x128xi32>
    %20 = arith.select %17, %19, %8 : vector<1x128xi1>, vector<1x128xi32>
    %c2_i32 = arith.constant 2 : i32
    %21 = vector.broadcast %c2_i32 : i32 to vector<1x128xi32>
    %22 = arith.cmpi sge, %20, %21 : vector<1x128xi32>
    %c6_i32 = arith.constant 6 : i32
    %23 = vector.broadcast %c6_i32 : i32 to vector<1x128xi32>
    %24 = arith.cmpi slt, %20, %23 : vector<1x128xi32>
    %25 = arith.andi %22, %24 : vector<1x128xi1>
    %c2_i32_6 = arith.constant 2 : i32
    %26 = vector.broadcast %c2_i32_6 : i32 to vector<1x128xi32>
    %27 = arith.cmpi eq, %20, %26 : vector<1x128xi32>
    %28 = arith.sitofp %0 : vector<1x128xi32> to vector<1x128xf32>
    %c124_i32 = arith.constant 124 : i32
    %29 = tpu.dynamic_rotate %28 by %c124_i32 dim 1 : vector<1x128xf32>, i32 -> vector<1x128xf32>
    %30 = arith.andi %27, %3 : vector<1x128xi1>
    %cst = arith.constant 1.000000e+00 : f32
    %cst_7 = arith.constant 0.000000e+00 : f32
    %31 = vector.broadcast %cst : f32 to vector<1x128xf32>
    %32 = vector.broadcast %cst_7 : f32 to vector<1x128xf32>
    %33 = arith.select %30, %31, %32 : vector<1x128xi1>, vector<1x128xf32>
    %34 = arith.addf %28, %33 : vector<1x128xf32>
    %35 = arith.andi %3, %25 : vector<1x128xi1>
    %cst_8 = arith.constant 1.000000e+00 : f32
    %36 = vector.broadcast %cst_8 : f32 to vector<1x128xf32>
    %37 = arith.select %35, %29, %36 : vector<1x128xi1>, vector<1x128xf32>
    %38 = arith.divf %34, %37 : vector<1x128xf32>
    %39 = math.floor %38 : vector<1x128xf32>
    %40 = arith.mulf %39, %37 : vector<1x128xf32>
    %41 = arith.cmpf ogt, %40, %34 : vector<1x128xf32>
    %42 = arith.extui %41 : vector<1x128xi1> to vector<1x128xi32>
    %43 = arith.sitofp %42 : vector<1x128xi32> to vector<1x128xf32>
    %44 = arith.subf %39, %43 : vector<1x128xf32>
    %45 = arith.mulf %37, %44 : vector<1x128xf32>
    %46 = arith.subf %34, %45 : vector<1x128xf32>
    %cst_9 = arith.constant 0.000000e+00 : f32
    %47 = vector.broadcast %cst_9 : f32 to vector<1x128xf32>
    %48 = arith.select %25, %44, %47 : vector<1x128xi1>, vector<1x128xf32>
    %c1_i32_10 = arith.constant 1 : i32
    %49 = tpu.dynamic_rotate %48 by %c1_i32_10 dim 1 : vector<1x128xf32>, i32 -> vector<1x128xf32>
    %cst_11 = arith.constant 0.000000e+00 : f32
    %50 = vector.broadcast %cst_11 : f32 to vector<1x128xf32>
    %51 = arith.select %27, %50, %49 : vector<1x128xi1>, vector<1x128xf32>
    %52 = arith.addf %46, %51 : vector<1x128xf32>
    %53 = arith.fptosi %52 : vector<1x128xf32> to vector<1x128xi32>
    %54 = arith.andi %25, %3 : vector<1x128xi1>
    %55 = arith.select %54, %53, %0 : vector<1x128xi1>, vector<1x128xi32>
    %c0_12 = arith.constant 0 : index
    %c0_13 = arith.constant 0 : index
    %56 = vector.load %arg3[%c0_12, %c0_13] : memref<1x128xi32, #tpu.memory_space<vmem>>, vector<1x128xi32>
    tpu.vector_store %arg3[%c0_12, %c0_13], %55 {strides = array<i32>} : memref<1x128xi32, #tpu.memory_space<vmem>>, vector<1x128xi32>,
    return
  }
  func.func @transform_0(%arg0: i32) -> (i32, i32) {
    %c0_i32 = arith.constant 0 : i32
    %c0_i32_0 = arith.constant 0 : i32
    return %arg0, %c0_i32 : i32, i32
  }
  func.func @transform_1(%arg0: i32) -> (i32, i32) {
    %c0_i32 = arith.constant 0 : i32
    %c0_i32_0 = arith.constant 0 : i32
    return %arg0, %c0_i32 : i32, i32
  }
  func.func @transform_2(%arg0: i32) -> (i32, i32) {
    %c0_i32 = arith.constant 0 : i32
    %c0_i32_0 = arith.constant 0 : i32
    return %arg0, %c0_i32 : i32, i32
  }
}

</mosaic_0001>

<llo_original>
// kernel: count_advance_regroup.1
$region0: #{count_advance_regroup.1}
  #allocation0 [shape = 'u32[]', space=smem, size = 0x4, offset = 0x4, fixed_abs, tag = 'smem constant byte address 0x4 - core index']
  #allocation1 [shape = 'u32[72,128]{1,0:T(1,128)}', space=vmem, size = 0x9000, scoped, tag = 'internal scratch']
  %s0 = inlined_call_operand.vmem [shape: s8[1,128], index: 0, kind: input, shape index: {}]
  %s1 = inlined_call_operand.vmem [shape: s32[1,128], index: 1, kind: input, shape index: {}, may-alias: {1,2}]
  %s2 = inlined_call_operand.vmem [shape: s32[1,128], index: 2, kind: output, shape index: {}, may-alias: {1,2}]
  %s3 = sld [smem:[#allocation0]]
  $region18: #{count_advance_regroup.1} parent=0
    _
  %s5 = ssub.s32 1, %s3
  %s6 = scalar_select 0, %s5, %s3
  // Predicated region
  $region2: #{count_advance_regroup.1} parent=0 // pred_check
    _
  $region3: #{count_advance_regroup.1} parent=0 // pred_check_branch
    %8 = sbr.rel (0) target = $region5
  $region4: #{count_advance_regroup.1} parent=0 // pred_region
    _
  $region5: #{count_advance_regroup.1} parent=0 // pred_fallthru
    _
  // Predicated region
  $region6: #{count_advance_regroup.1} parent=0 // pred_check
    _
  $region7: #{count_advance_regroup.1} parent=0 // pred_check_branch
    %10 = sbr.rel (0) target = $region9
  $region8: #{count_advance_regroup.1} parent=0 // pred_region
    _
  $region9: #{count_advance_regroup.1} parent=0 // pred_fallthru
    _
  %v13 = vld [vmem:[%s1] sm:$0x1]
  %v14 = vld [vmem:[%s0] sm:$0x1]
  %vm15 = vnez %v14
  %v16 = vlaneseq
  %v17 = vand.u32 %v16, 127
  %vm18 = vcmp.lt.s32.totalorder %v17, 0
  %v19 = vsub.s32 0, %v17
  %v20 = vsel %vm18, %v19, %v17
  %v21 = vshrl.u32 %v20, 4
  %v22 = vand.u32 %v20, 15
  %v23 = vsub.s32 0, %v22
  %v24 = vsel %vm18, %v23, %v22
  %vm25 = vcmp.ne.s32.totalorder %v24, 0
  %vm26 = vcmp.lt.s32.totalorder %v24, 0
  %vm27 = vmand %vm26, %vm25
  %v28 = vadd.s32 %v24, 16
  %v29 = vsel %vm27, %v28, %v24
  %vm30 = vcmp.ge.s32.totalorder %v29, 2
  %vm31 = vcmp.lt.s32.totalorder %v29, 6
  %vm32 = vmand %vm30, %vm31
  %vm33 = vcmp.eq.s32.totalorder %v29, 2
  %v34 = vcvt.s32.f32 %v13
  %35 = vrot.lane.b32.xlu0 %v34, 124
  %v36 = vpop.permute.xlu0 %35
  %v37 = vsel %vm15, 16843009, 0
  %v38 = vunpack.c.0.s8 %v37
  %vm39 = vcmp.ne.s32.totalorder %v38, 0
  %v40 = vsel %vm39, 1, 0
  %v41 = vperm.slane %v40, 0
  %vm42 = vcmp.ne.s32.totalorder %v41, 0
  %vm43 = vmand %vm33, %vm42
  %v44 = vsel %vm43, 1.0, 0.0
  %v45 = vadd.f32 %v34, %v44
  %v46 = vsel %vm32, 1, 0
  %v47 = vpack.c.b16 %v46, %v46
  %v48 = vpack.c.b8 %v47, %v47
  %vm49 = vnez %v48
  %vm50 = vmand %vm15, %vm49
  %v51 = vsel %vm50, 16843009, 0
  %v52 = vunpack.c.0.s8 %v51
  %vm53 = vcmp.ne.s32.totalorder %v52, 0
  %v54 = vsel %vm53, %v36, 1.0
  %v55 = vrcp.pop %v54
  %v56 = vmul.f32 %v54, %v55
  %v57 = vsub.f32 1.0, %v56
  %v58 = vmul.f32 %v55, %v57
  %v59 = vadd.f32 %v55, %v58
  %vm60 = vweird.f32 %v54
  %vm61 = vweird.f32 %v55
  %vm62 = vmor %vm60, %vm61
  %v63 = vsel %vm62, %v55, %v59
  %v64 = vand.u32 2147483647, %v54
  %vm65 = vcmp.eq.f32.partialorder %v64, 8.507059e+37
  %v66 = vand.u32 %v54, 2147483648
  %v67 = vor.u32 1.1754944e-38, %v66
  %v68 = vsel %vm65, %v67, %v63
  %v69 = vmul.f32 %v45, %v68
  %v70 = vfloor.f32 %v69
  %v71 = vmul.f32 %v70, %v54
  %vm72 = vcmp.gt.f32.partialorder %v71, %v45
  %v73 = vsel %vm72, 1, 0
  %v74 = vcvt.s32.f32 %v73
  %v75 = vsub.f32 %v70, %v74
  %v76 = vmul.f32 %v54, %v75
  %v77 = vsub.f32 %v45, %v76
  %v78 = vsel %vm32, %v75, 0.0
  %79 = vrot.lane.b32.xlu0 %v78, 1
  %v80 = vpop.permute.xlu0 %79
  %v81 = vsel %vm33, 0.0, %v80
  %v82 = vadd.f32 %v77, %v81
  %v83 = vcvt.f32.s32.to.zero.pseudo %v82
  %v84 = vsel %vm53, %v83, %v13
  %85 = vst [vmem:[%s2] sm:$0x1] %v84
  // Predicated region
  $region10: #{count_advance_regroup.1} parent=0 // pred_check
    _
  $region11: #{count_advance_regroup.1} parent=0 // pred_check_branch
    %87 = sbr.rel (0) target = $region13
  $region12: #{count_advance_regroup.1} parent=0 // pred_region
    _
  $region13: #{count_advance_regroup.1} parent=0 // pred_fallthru
    _
  // Predicated region
  $region14: #{count_advance_regroup.1} parent=0 // pred_check
    _
  $region15: #{count_advance_regroup.1} parent=0 // pred_check_branch
    %89 = sbr.rel (0) target = $region17
  $region16: #{count_advance_regroup.1} parent=0 // pred_region
    _
  $region17: #{count_advance_regroup.1} parent=0 // pred_fallthru
    _

</llo_original>
